<compile_context>
chip_gen: v7x
topology: tpu7x:2x2x1
jax: 0.10.0
libtpu: 0.0.40
codegen_flags: <defaults>
</compile_context>

<pallas_src>
import functools

import jax
import jax.numpy as jnp
from jax.experimental import pallas as pl
from jax.experimental.pallas import tpu as pltpu


def _ccac_kernel(logits_ref, side_ref, out_ref, *, lam1, lam2, n_rows):
    step = pl.program_id(0)

    x = logits_ref[...].astype(jnp.float32)                  # (TR, C), C = real width
    tr, c = x.shape

    # Numerically-stable log-softmax over the (full, unpadded) class axis.
    m = jnp.max(x, axis=1, keepdims=True)                    # (TR, 1)
    e = jnp.exp(x - m)
    lse = m + jnp.log(jnp.sum(e, axis=1, keepdims=True))     # (TR, 1)

    side = side_ref[...]                                     # (TR, 2) int32
    labels = side[:, 0:1]                                    # (TR, 1)
    gt = side[:, 1:2].astype(jnp.float32)                    # (TR, 1), 0/1

    # logit at the true label column (one-hot select) and at the last class (static slice).
    col = jax.lax.broadcasted_iota(jnp.int32, x.shape, 1)
    logit_label = jnp.sum(jnp.where(col == labels, x, 0.0), axis=1, keepdims=True)
    logit_last = x[:, c - 1:c]                                # (TR, 1)

    logp_label = logit_label - lse                            # log softmax[i, label]
    logp_last = logit_last - lse                              # log softmax[i, -1]

    # loss_1: NLL of the true label on ground-truth rows.
    loss1 = -gt * logp_label
    # loss_2: -lambda_1 * log(1 - p_last) on ground-truth rows (guarded, log1p for precision).
    log1m_plast = jnp.where(gt > 0.5, jnp.log1p(-jnp.exp(logp_last)), jnp.float32(0.0))
    loss2 = -jnp.float32(lam1) * log1m_plast
    # loss_3: -lambda_2 * log(p_last) on non-ground-truth rows.
    loss3 = -jnp.float32(lam2) * (1.0 - gt) * logp_last

    # Mask rows past the real batch (derived in-kernel; no extra input).
    row = step * tr + jax.lax.broadcasted_iota(jnp.int32, (tr, 1), 0)
    valid = row < n_rows
    partial = jnp.sum(jnp.where(valid, loss1 + loss2 + loss3, jnp.float32(0.0)))

    # Lane-dense per-block partial; wrapper reads element [block, 0, 0].
    out_ref[...] = jnp.full(out_ref.shape, partial, dtype=jnp.float32)


def loss_ccac_pallas(logits, labels, ground_truth, *, lambda_1, lambda_2,
                     num_classes, tile_rows=2048):
    n, c = logits.shape
    assert c == num_classes + 1, "logits must have num_classes + 1 columns"

    # Keep the double-buffered logits tile comfortably inside VMEM (safe on v7x too).
    itemsize = jnp.dtype(logits.dtype).itemsize
    max_tile_bytes = 8 * 1024 * 1024
    rows_cap = max(8, (max_tile_bytes // max(c * itemsize, 1)) // 8 * 8)
    tile_rows = min(tile_rows, rows_cap)
    # Don't over-pad tiny batches.
    tile_rows = min(tile_rows, pl.cdiv(n, 8) * 8)

    n_pad = pl.cdiv(n, tile_rows) * tile_rows
    num_blocks = n_pad // tile_rows

    side = jnp.stack([labels.astype(jnp.int32),
                      ground_truth.astype(jnp.int32)], axis=1)      # (N, 2)
    if n_pad != n:
        logits_p = jnp.pad(logits, ((0, n_pad - n), (0, 0)))
        side_p = jnp.pad(side, ((0, n_pad - n), (0, 0)))
    else:
        logits_p, side_p = logits, side

    kernel = functools.partial(_ccac_kernel, lam1=float(lambda_1),
                               lam2=float(lambda_2), n_rows=n)

    out = pl.pallas_call(
        kernel,
        out_shape=jax.ShapeDtypeStruct((num_blocks, 8, 128), jnp.float32),
        grid=(num_blocks,),
        in_specs=[
            pl.BlockSpec((tile_rows, c), lambda i: (i, 0)),   # full-C last dim, no pad
            pl.BlockSpec((tile_rows, 2), lambda i: (i, 0)),   # packed labels / gt
        ],
        out_specs=pl.BlockSpec((1, 8, 128), lambda i: (i, 0, 0)),
        compiler_params=pltpu.CompilerParams(
            dimension_semantics=("parallel",)),
    )(logits_p, side_p)

    return jnp.sum(out[:, 0, 0]) / jnp.float32(n)


def loss_ccac_reference(logits, labels, ground_truth, *, lambda_1, lambda_2):
    """Pure-JAX reference mirroring the PyTorch forward."""
    n = logits.shape[0]
    sm = jax.nn.softmax(logits.astype(jnp.float32), axis=1)
    p_label = sm[jnp.arange(n), labels]
    p_last = sm[:, -1]
    loss1 = -jnp.sum(jnp.where(ground_truth, jnp.log(p_label), 0.0))
    loss2 = -lambda_1 * jnp.sum(jnp.where(ground_truth, jnp.log1p(-p_last), 0.0))
    loss3 = -lambda_2 * jnp.sum(jnp.where(~ground_truth, jnp.log(p_last), 0.0))
    return (loss1 + loss2 + loss3) / n


def _check(out, ref, tag):
    out_f, ref_f = float(out), float(ref)
    assert abs(out_f - ref_f) <= 1e-4 * max(1.0, abs(ref_f)), (
        f"{tag} mismatch: pallas={out_f} ref={ref_f}")


if __name__ == "__main__":
    key = jax.random.PRNGKey(0)
    k1, k2, k3, k4, k5, k6 = jax.random.split(key, 6)

    num_classes = 10
    lambda_1, lambda_2 = 0.5, 0.25   # nonzero so all three loss terms are exercised

    # Case 1: tiny batch (single block), f32 logits.
    n1 = 8
    logits1 = 2.0 * jax.random.normal(k1, (n1, num_classes + 1), dtype=jnp.float32)
    labels1 = jax.random.randint(k2, (n1,), 0, num_classes, dtype=jnp.int32)
    gt1 = jax.random.bernoulli(k3, 0.6, (n1,))
    out1 = jax.block_until_ready(
        loss_ccac_pallas(logits1, labels1, gt1, lambda_1=lambda_1,
                         lambda_2=lambda_2, num_classes=num_classes))
    ref1 = jax.block_until_ready(
        loss_ccac_reference(logits1, labels1, gt1,
                            lambda_1=lambda_1, lambda_2=lambda_2))
    _check(out1, ref1, "case1")

    # Case 2: multi-block grid with row padding, bf16 logits kept in HBM dtype.
    n2 = 300
    logits2 = (2.0 * jax.random.normal(k4, (n2, num_classes + 1), dtype=jnp.float32)
               ).astype(jnp.bfloat16)
    labels2 = jax.random.randint(k5, (n2,), 0, num_classes, dtype=jnp.int32)
    gt2 = jax.random.bernoulli(k6, 0.6, (n2,))
    out2 = jax.block_until_ready(
        loss_ccac_pallas(logits2, labels2, gt2, lambda_1=lambda_1,
                         lambda_2=lambda_2, num_classes=num_classes,
                         tile_rows=128))
    ref2 = jax.block_until_ready(
        loss_ccac_reference(logits2.astype(jnp.float32), labels2, gt2,
                            lambda_1=lambda_1, lambda_2=lambda_2))
    _check(out2, ref2, "case2")

    print("KERNEL_OK")
</pallas_src>

<mosaic_0001>
module attributes {stable_mosaic.version = 11 : i64} {
  func.func @_ccac_kernel(%arg0: i32, %arg1: memref<8x11xf32, #tpu.memory_space<vmem>>, %arg2: memref<8x2xi32, #tpu.memory_space<vmem>>, %arg3: memref<1x8x128xf32, #tpu.memory_space<vmem>>) attributes {dimension_semantics = [#tpu.dimension_semantics<parallel>], iteration_bounds = array<i64: 1>, scalar_prefetch = 0 : i64, scratch_operands = 0 : i64, tpu.core_type = #tpu.core_type<tc>, window_params = [{transform_indices = @transform_0, window_bounds = array<i64: 8, 11>}, {transform_indices = @transform_1, window_bounds = array<i64: 8, 2>}, {transform_indices = @transform_2, window_bounds = array<i64: 1, 8, 128>}]} {
    %c0 = arith.constant 0 : index
    %c0_0 = arith.constant 0 : index
    %0 = vector.load %arg1[%c0, %c0_0] : memref<8x11xf32, #tpu.memory_space<vmem>>, vector<8x11xf32>
    %cst = arith.constant dense<0xFF800000> : vector<8xf32>
    %1 = vector.multi_reduction <maximumf>, %0, %cst [1] : vector<8x11xf32> to vector<8xf32>
    %2 = vector.shape_cast %1 : vector<8xf32> to vector<8x1xf32>
    %3 = vector.broadcast %2 : vector<8x1xf32> to vector<8x11xf32>
    %4 = arith.subf %0, %3 : vector<8x11xf32>
    %5 = math.exp %4 : vector<8x11xf32>
    %cst_1 = arith.constant dense<0.000000e+00> : vector<8xf32>
    %6 = vector.multi_reduction <add>, %5, %cst_1 [1] : vector<8x11xf32> to vector<8xf32>
    %7 = vector.shape_cast %6 : vector<8xf32> to vector<8x1xf32>
    %8 = math.log %7 : vector<8x1xf32>
    %9 = arith.addf %2, %8 : vector<8x1xf32>
    %c0_2 = arith.constant 0 : index
    %c0_3 = arith.constant 0 : index
    %10 = vector.load %arg2[%c0_2, %c0_3] : memref<8x2xi32, #tpu.memory_space<vmem>>, vector<8x2xi32>
    %11 = vector.extract_strided_slice %10 {offsets = [0, 0], sizes = [8, 1], strides = [1, 1]} : vector<8x2xi32> to vector<8x1xi32>
    %12 = vector.extract_strided_slice %10 {offsets = [0, 1], sizes = [8, 1], strides = [1, 1]} : vector<8x2xi32> to vector<8x1xi32>
    %13 = arith.sitofp %12 : vector<8x1xi32> to vector<8x1xf32>
    %14 = tpu.iota {dimensions = array<i32: 1>} : vector<8x11xi32>
    %15 = vector.broadcast %11 : vector<8x1xi32> to vector<8x11xi32>
    %16 = arith.cmpi eq, %14, %15 : vector<8x11xi32>
    %cst_4 = arith.constant 0.000000e+00 : f32
    %17 = vector.broadcast %cst_4 : f32 to vector<8x11xf32>
    %18 = arith.select %16, %0, %17 : vector<8x11xi1>, vector<8x11xf32>
    %cst_5 = arith.constant dense<0.000000e+00> : vector<8xf32>
    %19 = vector.multi_reduction <add>, %18, %cst_5 [1] : vector<8x11xf32> to vector<8xf32>
    %20 = vector.shape_cast %19 : vector<8xf32> to vector<8x1xf32>
    %21 = vector.extract_strided_slice %0 {offsets = [0, 10], sizes = [8, 1], strides = [1, 1]} : vector<8x11xf32> to vector<8x1xf32>
    %22 = arith.subf %20, %9 : vector<8x1xf32>
    %23 = arith.subf %21, %9 : vector<8x1xf32>
    %cst_6 = arith.constant 0.000000e+00 : f32
    %24 = vector.broadcast %cst_6 : f32 to vector<8x1xf32>
    %25 = arith.subf %24, %13 : vector<8x1xf32>
    %26 = arith.mulf %25, %22 : vector<8x1xf32>
    %cst_7 = arith.constant 5.000000e-01 : f32
    %27 = vector.broadcast %cst_7 : f32 to vector<8x1xf32>
    %28 = arith.cmpf ogt, %13, %27 : vector<8x1xf32>
    %29 = math.exp %23 : vector<8x1xf32>
    %cst_8 = arith.constant 0.000000e+00 : f32
    %30 = vector.broadcast %cst_8 : f32 to vector<8x1xf32>
    %31 = arith.subf %30, %29 : vector<8x1xf32>
    %32 = math.log1p %31 : vector<8x1xf32>
    %cst_9 = arith.constant 0.000000e+00 : f32
    %33 = vector.broadcast %cst_9 : f32 to vector<8x1xf32>
    %34 = arith.select %28, %32, %33 : vector<8x1xi1>, vector<8x1xf32>
    %cst_10 = arith.constant 0.000000e+00 : f32
    %cst_11 = arith.constant 5.000000e-01 : f32
    %35 = arith.subf %cst_10, %cst_11 : f32
    %36 = vector.broadcast %35 : f32 to vector<8x1xf32>
    %37 = arith.mulf %36, %34 : vector<8x1xf32>
    %cst_12 = arith.constant 0.000000e+00 : f32
    %cst_13 = arith.constant 2.500000e-01 : f32
    %38 = arith.subf %cst_12, %cst_13 : f32
    %cst_14 = arith.constant 1.000000e+00 : f32
    %39 = vector.broadcast %cst_14 : f32 to vector<8x1xf32>
    %40 = arith.subf %39, %13 : vector<8x1xf32>
    %41 = vector.broadcast %38 : f32 to vector<8x1xf32>
    %42 = arith.mulf %41, %40 : vector<8x1xf32>
    %43 = arith.mulf %42, %23 : vector<8x1xf32>
    %c8_i32 = arith.constant 8 : i32
    %44 = arith.muli %arg0, %c8_i32 : i32
    %45 = tpu.iota {dimensions = array<i32: 0>} : vector<8x1xi32>
    %46 = vector.broadcast %44 : i32 to vector<8x1xi32>
    %47 = arith.addi %46, %45 : vector<8x1xi32>
    %c8_i32_15 = arith.constant 8 : i32
    %48 = vector.broadcast %c8_i32_15 : i32 to vector<8x1xi32>
    %49 = arith.cmpi slt, %47, %48 : vector<8x1xi32>
    %50 = arith.addf %26, %37 : vector<8x1xf32>
    %51 = arith.addf %50, %43 : vector<8x1xf32>
    %cst_16 = arith.constant 0.000000e+00 : f32
    %52 = vector.broadcast %cst_16 : f32 to vector<8x1xf32>
    %53 = arith.select %49, %51, %52 : vector<8x1xi1>, vector<8x1xf32>
    %54 = vector.shape_cast %53 : vector<8x1xf32> to vector<1x8x1xf32>
    %cst_17 = arith.constant dense<0.000000e+00> : vector<1xf32>
    %55 = vector.multi_reduction <add>, %54, %cst_17 [1, 2] : vector<1x8x1xf32> to vector<1xf32>
    %56 = vector.shape_cast %55 : vector<1xf32> to vector<1x1x1xf32>
    %57 = vector.extract %56[0, 0, 0] : f32 from vector<1x1x1xf32>
    %58 = vector.broadcast %57 : f32 to vector<1x8x128xf32>
    %c0_18 = arith.constant 0 : index
    %c0_19 = arith.constant 0 : index
    %c0_20 = arith.constant 0 : index
    %59 = vector.load %arg3[%c0_18, %c0_19, %c0_20] : memref<1x8x128xf32, #tpu.memory_space<vmem>>, vector<1x8x128xf32>
    tpu.vector_store %arg3[%c0_18, %c0_19, %c0_20], %58 {strides = array<i32>} : memref<1x8x128xf32, #tpu.memory_space<vmem>>, vector<1x8x128xf32>,
    return
  }
  func.func @transform_0(%arg0: i32) -> (i32, i32) {
    %c0_i32 = arith.constant 0 : i32
    %c0_i32_0 = arith.constant 0 : i32
    return %arg0, %c0_i32 : i32, i32
  }
  func.func @transform_1(%arg0: i32) -> (i32, i32) {
    %c0_i32 = arith.constant 0 : i32
    %c0_i32_0 = arith.constant 0 : i32
    return %arg0, %c0_i32 : i32, i32
  }
  func.func @transform_2(%arg0: i32) -> (i32, i32, i32) {
    %c0_i32 = arith.constant 0 : i32
    %c0_i32_0 = arith.constant 0 : i32
    %c0_i32_1 = arith.constant 0 : i32
    return %arg0, %c0_i32, %c0_i32_0 : i32, i32, i32
  }
}

</mosaic_0001>

<llo_original>
// kernel: tpu_custom_call.1
$region0: #{tpu_custom_call.1}
  #allocation0 [shape = 'u32[]', space=smem, size = 0x4, offset = 0x4, fixed_abs, tag = 'smem constant byte address 0x4 - core index']
  #allocation1 [shape = 'u32[144,128]{1,0:T(1,128)}', space=vmem, size = 0x12000, scoped, tag = 'internal scratch']
  %s0 = inlined_call_operand.vmem [shape: f32[8,11], index: 0, kind: input, shape index: {}]
  %s1 = inlined_call_operand.vmem [shape: s32[8,2], index: 1, kind: input, shape index: {}]
  %s2 = inlined_call_operand.hbm [shape: f32[1,8,128], index: 2, kind: output, shape index: {}]
  %s3 = sld [smem:[#allocation0]]
  $region18: #{tpu_custom_call.1} parent=0
    _
  %s5 = ssub.s32 1, %s3
  %s6 = scalar_select 0, %s5, %s3
  $region1: #{tpu_custom_call.1} parent=0
    #allocation2 [shape = 'u8[4096]{0}', space=vmem, size = 0x1000, scoped, tag = 'output window, operand 0, single buffered']
    #allocation3 [shape = 's32[1]{0}', space=sflag, size = 0x4, scoped, tag = 'scoped memory for tpu_custom_call.1']
    %7 = vsyncpa [#allocation3], 0
    // Predicated region
    $region2: #{tpu_custom_call.1} parent=1 // pred_check
      _
    $region3: #{tpu_custom_call.1} parent=1 // pred_check_branch
      %9 = sbr.rel (0) target = $region5
    $region4: #{tpu_custom_call.1} parent=1 // pred_region
      _
    $region5: #{tpu_custom_call.1} parent=1 // pred_fallthru
      _
    // Predicated region
    $region6: #{tpu_custom_call.1} parent=1 // pred_check
      _
    $region7: #{tpu_custom_call.1} parent=1 // pred_check_branch
      %11 = sbr.rel (0) target = $region9
    $region8: #{tpu_custom_call.1} parent=1 // pred_region
      _
    $region9: #{tpu_custom_call.1} parent=1 // pred_fallthru
      _
    %v12 = vld [vmem:[%s0] sm:$0xff]
    %vm13 = vcmask 89088
    %v14 = vsel %vm13, %v12, -inf
    %15 = vmax.xlane.f32.xlu0 %v14
    %v16 = vpop.xlane.xlu0 %15
    %v17 = vsub.f32 %v12, %v16
    %v18 = vmul.f32 %v17, 1.442695
    %v19 = vpow.pop %v18
    %v20 = vsel %vm13, %v19, 0.0
    %21 = vadd.xlane.f32.xlu0 %v20
    %v22 = vpop.xlane.xlu0 %21
    %v23 = vlog2.pop %v22
    %v24 = vmul.f32 %v23, 0.6931472
    %v25 = vadd.f32 %v16, %v24
    %v26 = vld [vmem:[%s1] sm:$0xff]
    %v27 = vcvt.s32.f32 %v26
    %v28 = vlaneseq
    %v29 = vand.u32 %v28, 127
    %30 = vset.pattern.permute.xlu0 0
    %31 = vperm.xlu0 %30, %v26
    %v32 = vpop.permute.xlu0 %31
    %vm33 = vcmp.eq.s32.totalorder %v29, %v32
    %v34 = vsel %vm33, %v12, 0.0
    %v35 = vsel %vm13, %v34, 0.0
    %36 = vadd.xlane.f32.xlu0 %v35
    %v37 = vpop.xlane.xlu0 %36
    %v38 = vsub.f32 %v37, %v25
    %v39 = vsub.f32 %v12, %v25
    %v40 = vsub.f32 0.0, %v27
    %v41 = vmul.f32 %v40, %v38
    %vm42 = vcmp.gt.f32.partialorder %v27, 0.5
    %v43 = vmul.f32 %v39, 1.442695
    %v44 = vpow.pop %v43
    %v45 = vsub.f32 0.0, %v44
    %v46 = vadd.f32 %v45, 1.0
    %v47 = vlog2.pop %v46
    %v48 = vmul.f32 %v47, 0.6931472
    %v49 = vmul.f32 -0.5, %v45
    %v50 = vadd.f32 %v49, 1.0
    %v51 = vmul.f32 %v50, %v45
    %v52 = vand.u32 2147483647, %v45
    %vm53 = vcmp.lt.f32.partialorder %v52, 0.0004427343
    %v54 = vsel %vm53, %v51, %v48
    %56 = vrot.lane.b32.xlu0 %v54, 119
    %v57 = vpop.permute.xlu0 %56
    %v59 = vsel %vm42, %v57, 0.0
    %v60 = vmul.f32 %v59, -0.5
    %v61 = vsub.f32 1.0, %v27
    %v62 = vmul.f32 %v61, -0.25
    %64 = vrot.lane.b32.xlu0 %v39, 119
    %v65 = vpop.permute.xlu0 %64
    %v67 = vmul.f32 %v62, %v65
    %s68 = smul.u32 0, 8
    %v69 = vlaneseq
    %v70 = vshrl.u32 %v69, 7
    %v71 = vstv %s68
    %v72 = vadd.s32 %v71, %v70
    %vm73 = vcmp.lt.s32.totalorder %v72, 8
    %v74 = vadd.f32 %v41, %v60
    %v75 = vadd.f32 %v74, %v67
    %v76 = vsel %vm73, %v75, 0.0
    %78 = vrot.lane.b32.xlu0 %v76, 127
    %v79 = vpop.permute.xlu0 %78
    %vm81 = vcmask 7168
    %v82 = vsel %vm81, %v79, 0.0
    %83 = vadd.xlane.f32.xlu0 %v82
    %v84 = vpop.xlane.xlu0 %83
    %v85 = vrot.slane %v84, 4
    %v86 = vadd.f32 %v84, %v85
    %v87 = vrot.slane %v86, 2
    %v88 = vadd.f32 %v86, %v87
    %v89 = vrot.slane %v88, 1
    %v90 = vadd.f32 %v88, %v89
    %s91 = vtos %v90
    %v92 = vstv %s91
    %93 = vst [vmem:[#allocation2] sm:$0xff] %v92
    // Predicated region
    $region10: #{tpu_custom_call.1} parent=1 // pred_check
      _
    $region11: #{tpu_custom_call.1} parent=1 // pred_check_branch
      %95 = sbr.rel (0) target = $region13
    $region12: #{tpu_custom_call.1} parent=1 // pred_region
      %s97 = ssub.s32 128, 128
      %98 = vsyncadd [#allocation3], %s97
      %s100 = sshll.u32 [#allocation2], 4
      %s101 = int_to_ptr.vmem [resolvable:$true] %s100
      %103 = dma.vmem_to_hbm [thread:$0]  %s101, 128, %s2, [#allocation3]
    $region13: #{tpu_custom_call.1} parent=1 // pred_fallthru
      _
    // Predicated region
    $region14: #{tpu_custom_call.1} parent=1 // pred_check
      _
    $region15: #{tpu_custom_call.1} parent=1 // pred_check_branch
      %105 = sbr.rel (0) target = $region17
    $region16: #{tpu_custom_call.1} parent=1 // pred_region
      %106 = dma.done [#allocation3], 128
    $region17: #{tpu_custom_call.1} parent=1 // pred_fallthru
      _
    %107 = vsyncpa [#allocation3], 1

</llo_original>
